<compile_context>
chip_gen: v7x
topology: tpu7x:2x2x1
jax: 0.10.0
libtpu: 0.0.40
codegen_flags: <defaults>
</compile_context>

<pallas_src>
import jax
import jax.numpy as jnp
from jax.experimental import pallas as pl
from jax.experimental.pallas import tpu as pltpu


def _copy_kernel(src_ref, out_ref):
    # Pure tile copy: one VMEM block of the positional table -> output.
    out_ref[...] = src_ref[...]


def _round_up(n: int, m: int) -> int:
    return -(-n // m) * m


def learnable_positional_embedding(x, pos_embedding):
    """Forward of LearnablePositionalEmbedding.

    x:              (B, seq_len, ...) — only seq_len = x.shape[1] is used.
    pos_embedding:  (1, max_len, d_model) learnable parameter.
    returns:        (1, seq_len, d_model) == pos_embedding[:, :seq_len, :]
    """
    seq_len = x.shape[1]
    _, max_len, d_model = pos_embedding.shape
    assert seq_len <= max_len, "seq_len exceeds max_len of the positional table"
    dtype = pos_embedding.dtype

    n_out = seq_len * d_model
    n_tab = max_len * d_model

    if n_out % 128 == 0 and n_tab % 128 == 0:
        # Lane-dense path: the slice pos_embedding[:, :seq_len, :] is a
        # contiguous prefix of the row-major table, so copy it through a
        # (rows, 128) view -> every load/store uses all 128 lanes.
        tab2d = pos_embedding.reshape(n_tab // 128, 128)
        out_rows = n_out // 128
        tile_rows = min(1024, _round_up(out_rows, 8))
        grid = (pl.cdiv(out_rows, tile_rows),)

        out = pl.pallas_call(
            _copy_kernel,
            out_shape=jax.ShapeDtypeStruct((out_rows, 128), dtype),
            grid=grid,
            in_specs=[pl.BlockSpec((tile_rows, 128), lambda i: (i, 0))],
            out_specs=pl.BlockSpec((tile_rows, 128), lambda i: (i, 0)),
            compiler_params=pltpu.CompilerParams(
                dimension_semantics=("parallel",)
            ),
        )(tab2d)
        return out.reshape(1, seq_len, d_model)

    # Fallback path (shapes not 128-divisible): copy (tile_seq, d_model)
    # blocks with d_model as the (full) lane dimension.
    table = pos_embedding.reshape(max_len, d_model)
    tile_seq = min(512, _round_up(seq_len, 8))
    grid = (pl.cdiv(seq_len, tile_seq),)

    out = pl.pallas_call(
        _copy_kernel,
        out_shape=jax.ShapeDtypeStruct((seq_len, d_model), dtype),
        grid=grid,
        in_specs=[pl.BlockSpec((tile_seq, d_model), lambda i: (i, 0))],
        out_specs=pl.BlockSpec((tile_seq, d_model), lambda i: (i, 0)),
        compiler_params=pltpu.CompilerParams(
            dimension_semantics=("parallel",)
        ),
    )(table)
    return out.reshape(1, seq_len, d_model)


if __name__ == "__main__":
    # Small, deterministic example consistent with the module:
    #   batch=2, seq_len=8, d_model=32, max_len=128.
    B, seq_len, d_model, max_len = 2, 8, 32, 128
    key = jax.random.PRNGKey(0)
    kx, kp = jax.random.split(key)
    x = jax.random.normal(kx, (B, seq_len, d_model), dtype=jnp.float32)
    pos_embedding = jax.random.normal(kp, (1, max_len, d_model), dtype=jnp.float32)

    out = learnable_positional_embedding(x, pos_embedding)
    out = jax.block_until_ready(out)

    ref = pos_embedding[:, :seq_len, :]
    assert out.shape == (1, seq_len, d_model)
    assert jnp.array_equal(out, ref), "mismatch vs reference slice"
    print("KERNEL_OK")
</pallas_src>

<mosaic_0001>
module attributes {stable_mosaic.version = 11 : i64} {
  func.func @_copy_kernel(%arg0: i32, %arg1: memref<8x128xf32, #tpu.memory_space<vmem>>, %arg2: memref<8x128xf32, #tpu.memory_space<vmem>>) attributes {dimension_semantics = [#tpu.dimension_semantics<parallel>], iteration_bounds = array<i64: 1>, scalar_prefetch = 0 : i64, scratch_operands = 0 : i64, tpu.core_type = #tpu.core_type<tc>, window_params = [{transform_indices = @transform_0, window_bounds = array<i64: 8, 128>}, {transform_indices = @transform_1, window_bounds = array<i64: 8, 128>}]} {
    %c0 = arith.constant 0 : index
    %c0_0 = arith.constant 0 : index
    %0 = vector.load %arg1[%c0, %c0_0] : memref<8x128xf32, #tpu.memory_space<vmem>>, vector<8x128xf32>
    %c0_1 = arith.constant 0 : index
    %c0_2 = arith.constant 0 : index
    %1 = vector.load %arg2[%c0_1, %c0_2] : memref<8x128xf32, #tpu.memory_space<vmem>>, vector<8x128xf32>
    tpu.vector_store %arg2[%c0_1, %c0_2], %0 {strides = array<i32>} : memref<8x128xf32, #tpu.memory_space<vmem>>, vector<8x128xf32>,
    return
  }
  func.func @transform_0(%arg0: i32) -> (i32, i32) {
    %c0_i32 = arith.constant 0 : i32
    %c0_i32_0 = arith.constant 0 : i32
    return %arg0, %c0_i32 : i32, i32
  }
  func.func @transform_1(%arg0: i32) -> (i32, i32) {
    %c0_i32 = arith.constant 0 : i32
    %c0_i32_0 = arith.constant 0 : i32
    return %arg0, %c0_i32 : i32, i32
  }
}

</mosaic_0001>

<llo_original>
// kernel: tpu_custom_call.1
$region0: #{tpu_custom_call.1}
  #allocation0 [shape = 'u32[]', space=smem, size = 0x4, offset = 0x4, fixed_abs, tag = 'smem constant byte address 0x4 - core index']
  #allocation1 [shape = 'u32[144,128]{1,0:T(1,128)}', space=vmem, size = 0x12000, scoped, tag = 'internal scratch']
  %s0 = inlined_call_operand.hbm [shape: f32[32,128], index: 0, kind: input, shape index: {}]
  %s1 = inlined_call_operand.hbm [shape: f32[2,128], index: 1, kind: output, shape index: {}]
  %s2 = sld [smem:[#allocation0]]
  $region18: #{tpu_custom_call.1} parent=0
    _
  %s4 = ssub.s32 1, %s2
  %s5 = scalar_select 0, %s4, %s2
  $region1: #{tpu_custom_call.1} parent=0
    #allocation2 [shape = 'u8[4096]{0}', space=vmem, size = 0x1000, scoped, tag = 'input window, operand 0, single buffered']
    #allocation3 [shape = 's32[1]{0}', space=sflag, size = 0x4, scoped, tag = 'scoped memory for tpu_custom_call.1']
    #allocation4 [shape = 's32[1]{0}', space=sflag, size = 0x4, scoped, tag = 'scoped memory for tpu_custom_call.1']
    #allocation5 [shape = 'u8[4096]{0}', space=vmem, size = 0x1000, scoped, tag = 'output window, operand 0, single buffered']
    %6 = vsyncpa [#allocation3], 0
    %7 = vsyncpa [#allocation4], 0
    // Predicated region
    $region2: #{tpu_custom_call.1} parent=1 // pred_check
      _
    $region3: #{tpu_custom_call.1} parent=1 // pred_check_branch
      %9 = sbr.rel (0) target = $region5
    $region4: #{tpu_custom_call.1} parent=1 // pred_region
      %s11 = ssub.s32 128, 128
      %12 = vsyncadd [#allocation3], %s11
      %s14 = sshll.u32 [#allocation2], 4
      %s15 = int_to_ptr.vmem [resolvable:$true] %s14
      %17 = dma.hbm_to_vmem [thread:$0]  %s0, 128, %s15, [#allocation3]
    $region5: #{tpu_custom_call.1} parent=1 // pred_fallthru
      _
    // Predicated region
    $region6: #{tpu_custom_call.1} parent=1 // pred_check
      _
    $region7: #{tpu_custom_call.1} parent=1 // pred_check_branch
      %19 = sbr.rel (0) target = $region9
    $region8: #{tpu_custom_call.1} parent=1 // pred_region
      %20 = dma.done [#allocation3], 128
    $region9: #{tpu_custom_call.1} parent=1 // pred_fallthru
      _
    %v21 = vld [vmem:[#allocation2] sm:$0xff]
    %22 = vst [vmem:[#allocation5] sm:$0xff] %v21
    // Predicated region
    $region10: #{tpu_custom_call.1} parent=1 // pred_check
      _
    $region11: #{tpu_custom_call.1} parent=1 // pred_check_branch
      %24 = sbr.rel (0) target = $region13
    $region12: #{tpu_custom_call.1} parent=1 // pred_region
      %s26 = ssub.s32 128, 32
      %27 = vsyncadd [#allocation4], %s26
      %s28 = sshll.u32 [#allocation5], 4
      %s29 = int_to_ptr.vmem [resolvable:$true] %s28
      %34 = dma.vmem_to_hbm [thread:$0]  %s29, 32, %s1, [#allocation4], 32, 32, 2
    $region13: #{tpu_custom_call.1} parent=1 // pred_fallthru
      _
    // Predicated region
    $region14: #{tpu_custom_call.1} parent=1 // pred_check
      _
    $region15: #{tpu_custom_call.1} parent=1 // pred_check_branch
      %36 = sbr.rel (0) target = $region17
    $region16: #{tpu_custom_call.1} parent=1 // pred_region
      %37 = dma.done [#allocation4], 128
    $region17: #{tpu_custom_call.1} parent=1 // pred_fallthru
      _
    %38 = vsyncpa [#allocation3], 1
    %39 = vsyncpa [#allocation4], 1

</llo_original>
